<compile_context>
chip_gen: v5e
topology: v5e:2x2
jax: 0.10.0
libtpu: 0.0.40
codegen_flags: <defaults>
</compile_context>

<pallas_src>
import math
import functools

import jax
import jax.numpy as jnp
from jax import lax
from jax.experimental import pallas as pl
from jax.experimental.pallas import tpu as pltpu

_LANE = 128
_SUBLANE = 8
# Keep 2x-in + 2x-out pipeline buffers inside every generation's *default*
# scoped VMEM (16 MiB on v5e) with headroom for compiler scratch.
_VMEM_BUDGET = 12 * 1024 * 1024


def _round_up(x, m):
    return ((x + m - 1) // m) * m


def _round_down(x, m):
    return (x // m) * m


def _pick_tiling(extent, *, unit_bytes, chunk, target_block_bytes,
                 vmem_budget=_VMEM_BUDGET, min_grid=4):
    """Pick (tile, grid) for a single gridded axis of length `extent`.

    `unit_bytes` is the block footprint added per unit along the gridded axis.
    `tile` is a multiple of `chunk` (or == extent when extent <= chunk).  The
    last grid block may be ragged; Pallas masks out-of-bounds reads/writes.
    """
    if extent <= chunk:
        return extent, 1
    # Hard VMEM cap (2x in + 2x out buffers per block) and soft size target.
    cap = max(chunk, _round_down((vmem_budget // 4) // unit_bytes, chunk))
    tgt = max(chunk, _round_down(target_block_bytes // unit_bytes, chunk))
    max_tile = min(cap, tgt)
    extent_al = _round_up(extent, chunk)
    max_blocks = extent_al // chunk
    num_blocks = pl.cdiv(extent_al, max_tile)
    # Megacore / pipelining: prefer >= min_grid steps and an even count
    # (v7x shards a "parallel" grid axis across its 2 TensorCores).
    num_blocks = min(max(num_blocks, min(min_grid, max_blocks)), max_blocks)
    if num_blocks % 2 == 1 and num_blocks < max_blocks:
        num_blocks += 1
    tile = _round_up(pl.cdiv(extent_al, num_blocks), chunk)
    grid = pl.cdiv(extent, tile)
    return tile, grid


def _maybe_vmem_limit(block_bytes):
    """Raise the scoped-VMEM limit only when the minimum legal block overflows
    the default budget (long-T workloads); stay under v7x's 64 MiB physical."""
    need = 4 * block_bytes
    if need <= _VMEM_BUDGET:
        return None
    return min(need + (4 << 20), 48 * 1024 * 1024)


# --------------------------------------------------------------------------- #
# Kernels
# --------------------------------------------------------------------------- #
def _threshold_kernel(x_ref, o_ref, *, vthr):
    """tau == 0 specialization: mem[t] = x[t], pure streaming threshold."""
    vthr_f = jnp.float32(vthr)
    x = x_ref[...].astype(jnp.float32)
    o_ref[...] = jnp.where(x >= vthr_f, vthr_f, jnp.float32(0.0)).astype(o_ref.dtype)


def _gs_kernel_rows(x_ref, o_ref, *, T, vthr, tau, mem_init, hard_reset,
                    chunk_r, unroll):
    """Leaky recurrence on a lane-dense (T, tile_r, 128) block."""
    tile_r = x_ref.shape[1]
    num_chunks = tile_r // chunk_r
    out_dt = o_ref.dtype
    vthr_f = jnp.float32(vthr)
    tau_f = jnp.float32(tau)
    zero_f = jnp.float32(0.0)
    # Hoisted out of the chunk loop (JAX does not CSE broadcast_in_dim).
    mem0 = jnp.full((chunk_r, _LANE), jnp.float32(mem_init), jnp.float32)

    # Chunk loop outer (keeps the mem carry at chunk_r/8 vregs), bounded-unroll
    # time loop inner for LLO scheduling visibility without IMEM bloat.
    @pl.loop(0, num_chunks)
    def _(c):
        r0 = pl.multiple_of(c * chunk_r, chunk_r)

        def time_step(t, mem):
            x_t = x_ref[t, pl.ds(r0, chunk_r), :].astype(jnp.float32)
            mem = mem * tau_f + x_t
            fired = mem >= vthr_f
            out = jnp.where(fired, vthr_f, zero_f)          # spike * vthr
            if hard_reset:
                mem = jnp.where(fired, zero_f, mem)          # mem * (1 - spike)
            else:
                mem = mem - out                              # mem - spike*vthr
            o_ref[t, pl.ds(r0, chunk_r), :] = out.astype(out_dt)
            return mem

        lax.fori_loop(0, T, time_step, mem0, unroll=unroll)


def _gs_kernel_cols(x_ref, o_ref, *, T, vthr, tau, mem_init, hard_reset, chunk_n):
    """Leaky recurrence on a (T, tile_n) block (lane-unaligned fallback path).

    The per-timestep slab is a single logical row, so the time index is a
    static Python loop to keep all sublane offsets static.
    TODO(synk): for very large T this bloats IMEM on this rare fallback path.
    """
    tile_n = x_ref.shape[1]
    num_chunks = tile_n // chunk_n
    out_dt = o_ref.dtype
    vthr_f = jnp.float32(vthr)
    tau_f = jnp.float32(tau)
    zero_f = jnp.float32(0.0)
    mem0 = jnp.full((1, chunk_n), jnp.float32(mem_init), jnp.float32)

    @pl.loop(0, num_chunks)
    def _(c):
        c0 = pl.multiple_of(c * chunk_n, chunk_n)
        mem = mem0
        for t in range(T):
            x_t = x_ref[pl.ds(t, 1), pl.ds(c0, chunk_n)].astype(jnp.float32)
            mem = mem * tau_f + x_t
            fired = mem >= vthr_f
            out = jnp.where(fired, vthr_f, zero_f)
            mem = jnp.where(fired, zero_f, mem) if hard_reset else mem - out
            o_ref[pl.ds(t, 1), pl.ds(c0, chunk_n)] = out.astype(out_dt)


# --------------------------------------------------------------------------- #
# Wrapper (BaseLayer.forward)
# --------------------------------------------------------------------------- #
def base_layer_forward(x, *, T=10, vthr=1.0, tau=0.0, mem_init=0.0,
                       reset_mode="hard", multistep=True,
                       target_block_bytes=2 * 1024 * 1024,
                       chunk_rows=32, time_unroll=8):
    """BaseLayer.forward: reshape (T*B, ...) -> (T, B, ...) and run GS neuron."""
    if multistep:
        assert x.shape[0] % T == 0, "leading dim must be divisible by T"
        batch_size = x.shape[0] // T
        out_shape = (T, batch_size) + tuple(x.shape[1:])
    else:
        T = 1                                           # unsqueeze(0) path
        out_shape = (1,) + tuple(x.shape)

    dtype = x.dtype
    itemsize = jnp.dtype(dtype).itemsize
    n = int(math.prod(x.shape)) // T                    # elements per timestep
    total = T * n
    hard_reset = (reset_mode == "hard")
    vthr = float(vthr)
    tau = float(tau)
    mem_init = float(mem_init)
    sem = ("parallel",)

    def _call(kernel, view, block, index_map, grid, block_bytes):
        return pl.pallas_call(
            kernel,
            out_shape=jax.ShapeDtypeStruct(view.shape, dtype),
            grid_spec=pltpu.PrefetchScalarGridSpec(
                num_scalar_prefetch=0,
                grid=(grid,),
                in_specs=[pl.BlockSpec(block, index_map)],
                out_specs=pl.BlockSpec(block, index_map)),
            compiler_params=pltpu.CompilerParams(
                dimension_semantics=sem,
                vmem_limit_bytes=_maybe_vmem_limit(block_bytes)),
        )(view)

    # ---------------------------------------------------------------- tau == 0
    # mem[t] = 0*mem[t-1] + x[t]: no time coupling -> flat streaming threshold,
    # gridded purely by the VMEM budget (best TC balance on v7x).
    if tau == 0.0:
        kernel = functools.partial(_threshold_kernel, vthr=vthr)
        if total % _LANE == 0:
            rows = total // _LANE
            tile_r, grid = _pick_tiling(rows, unit_bytes=_LANE * itemsize,
                                        chunk=_SUBLANE,
                                        target_block_bytes=target_block_bytes)
            view = x.reshape(rows, _LANE)
            block = (tile_r, _LANE)
            index_map = lambda i: (i, 0)
            block_bytes = tile_r * _LANE * itemsize
        else:
            chunk_n = n if n < _LANE else _LANE
            tile_n, grid = _pick_tiling(n, unit_bytes=T * itemsize,
                                        chunk=chunk_n,
                                        target_block_bytes=target_block_bytes)
            view = x.reshape(T, n)
            block = (T, tile_n)
            index_map = lambda i: (0, i)
            block_bytes = T * tile_n * itemsize
        spikes = _call(kernel, view, block, index_map, grid, block_bytes)
        return spikes.reshape(out_shape)

    # ------------------------------------------------------- leaky, aligned n
    if n % _LANE == 0:
        rows = n // _LANE
        view = x.reshape(T, rows, _LANE)
        if rows <= _SUBLANE:
            c_r, tile_r, grid = rows, rows, 1
        else:
            unit = T * _LANE * itemsize                  # bytes per row across T
            cap_rows = max(_SUBLANE,
                           _round_down((_VMEM_BUDGET // 4) // unit, _SUBLANE))
            c_r = min(chunk_rows,
                      max(_SUBLANE, _round_down(rows // 2, _SUBLANE)),
                      cap_rows)
            tile_r, grid = _pick_tiling(rows, unit_bytes=unit, chunk=c_r,
                                        target_block_bytes=target_block_bytes)
        kernel = functools.partial(
            _gs_kernel_rows, T=T, vthr=vthr, tau=tau, mem_init=mem_init,
            hard_reset=hard_reset, chunk_r=c_r, unroll=min(T, time_unroll))
        block = (T, tile_r, _LANE)
        block_bytes = T * tile_r * _LANE * itemsize
        spikes = _call(kernel, view, block, lambda i: (0, i, 0), grid, block_bytes)
        return spikes.reshape(out_shape)

    # -------------------------------------------------- leaky, unaligned n
    # n not a multiple of 128: tile a (T, n) view along the lane axis; the
    # ragged last block is boundary-masked by Pallas (no host pad, no slice).
    view = x.reshape(T, n)
    chunk_n = n if n < _LANE else min(512, _round_down(n, _LANE))
    tile_n, grid = _pick_tiling(n, unit_bytes=T * itemsize, chunk=chunk_n,
                                target_block_bytes=target_block_bytes)
    kernel = functools.partial(
        _gs_kernel_cols, T=T, vthr=vthr, tau=tau, mem_init=mem_init,
        hard_reset=hard_reset, chunk_n=min(chunk_n, tile_n))
    block = (T, tile_n)
    block_bytes = T * tile_n * itemsize
    spikes = _call(kernel, view, block, lambda i: (0, i), grid, block_bytes)
    return spikes.reshape(out_shape)


# --------------------------------------------------------------------------- #
# Pure-JAX reference
# --------------------------------------------------------------------------- #
def _reference_forward(x, *, T, vthr, tau, mem_init, reset_mode):
    batch_size = x.shape[0] // T
    xt = x.reshape((T, batch_size) + tuple(x.shape[1:])).astype(jnp.float32)

    def step(mem, x_t):
        mem = mem * tau + x_t
        spike = (mem >= vthr).astype(jnp.float32)
        if reset_mode == "hard":
            mem = mem * (1.0 - spike)
        else:
            mem = mem - spike * vthr
        return mem, spike * vthr

    mem0 = jnp.full_like(xt[0], mem_init)
    _, spikes = lax.scan(step, mem0, xt)
    return spikes


if __name__ == "__main__":
    T = 10
    key = jax.random.PRNGKey(0)
    k1, k2 = jax.random.split(key)

    # 1) Module defaults (vthr=1, tau=0, hard reset), lane-aligned shapes:
    #    flat streaming-threshold path.
    B, C, H, W = 2, 4, 16, 16
    x1 = jax.random.normal(k1, (T * B, C, H, W), dtype=jnp.float32) * 1.5
    p1 = dict(vthr=1.0, tau=0.0, mem_init=0.0, reset_mode="hard")
    out1 = jax.block_until_ready(
        jax.jit(functools.partial(base_layer_forward, T=T, multistep=True, **p1))(x1))
    ref1 = _reference_forward(x1, T=T, **p1)
    assert out1.shape == (T, B, C, H, W), out1.shape
    assert jnp.allclose(out1, ref1, atol=1e-6), "tau=0 path mismatch vs reference"

    # 2) Leaky config (tau=0.5, soft reset), lane-aligned: (T, rows, 128)
    #    in-register recurrence.
    p2 = dict(vthr=1.0, tau=0.5, mem_init=0.0, reset_mode="soft")
    out2 = jax.block_until_ready(
        jax.jit(functools.partial(base_layer_forward, T=T, multistep=True, **p2))(x1))
    ref2 = _reference_forward(x1, T=T, **p2)
    assert out2.shape == (T, B, C, H, W), out2.shape
    assert jnp.allclose(out2, ref2, atol=1e-5), "tau=0.5 path mismatch vs reference"

    # 3) Leaky config on a lane-UNALIGNED shape (H=W=15 -> 1800 elems/step):
    #    exercises the no-pad/no-slice ragged path with boundary-masked blocks.
    H3 = W3 = 15
    x3 = jax.random.normal(k2, (T * B, C, H3, W3), dtype=jnp.float32) * 1.5
    p3 = dict(vthr=1.0, tau=0.5, mem_init=0.0, reset_mode="hard")
    out3 = jax.block_until_ready(
        jax.jit(functools.partial(base_layer_forward, T=T, multistep=True, **p3))(x3))
    ref3 = _reference_forward(x3, T=T, **p3)
    assert out3.shape == (T, B, C, H3, W3), out3.shape
    assert jnp.allclose(out3, ref3, atol=1e-5), "unaligned path mismatch vs reference"

    print("KERNEL_OK")
</pallas_src>

<mosaic_0001>
module attributes {stable_mosaic.version = 11 : i64} {
  func.func @_threshold_kernel(%arg0: i32, %arg1: memref<40x128xf32, #tpu.memory_space<vmem>>, %arg2: memref<40x128xf32, #tpu.memory_space<vmem>>) attributes {dimension_semantics = [#tpu.dimension_semantics<parallel>], iteration_bounds = array<i64: 4>, scalar_prefetch = 0 : i64, scratch_operands = 0 : i64, tpu.core_type = #tpu.core_type<tc>, window_params = [{transform_indices = @transform_0, window_bounds = array<i64: 40, 128>}, {transform_indices = @transform_1, window_bounds = array<i64: 40, 128>}]} {
    %c0 = arith.constant 0 : index
    %c0_0 = arith.constant 0 : index
    %0 = vector.load %arg1[%c0, %c0_0] : memref<40x128xf32, #tpu.memory_space<vmem>>, vector<40x128xf32>
    %cst = arith.constant 1.000000e+00 : f32
    %1 = vector.broadcast %cst : f32 to vector<40x128xf32>
    %2 = arith.cmpf oge, %0, %1 : vector<40x128xf32>
    %cst_1 = arith.constant 1.000000e+00 : f32
    %cst_2 = arith.constant 0.000000e+00 : f32
    %3 = vector.broadcast %cst_1 : f32 to vector<40x128xf32>
    %4 = vector.broadcast %cst_2 : f32 to vector<40x128xf32>
    %5 = arith.select %2, %3, %4 : vector<40x128xi1>, vector<40x128xf32>
    %c0_3 = arith.constant 0 : index
    %c0_4 = arith.constant 0 : index
    %6 = vector.load %arg2[%c0_3, %c0_4] : memref<40x128xf32, #tpu.memory_space<vmem>>, vector<40x128xf32>
    tpu.vector_store %arg2[%c0_3, %c0_4], %5 {strides = array<i32>} : memref<40x128xf32, #tpu.memory_space<vmem>>, vector<40x128xf32>,
    return
  }
  func.func @transform_0(%arg0: i32) -> (i32, i32) {
    %c0_i32 = arith.constant 0 : i32
    %c0_i32_0 = arith.constant 0 : i32
    return %arg0, %c0_i32 : i32, i32
  }
  func.func @transform_1(%arg0: i32) -> (i32, i32) {
    %c0_i32 = arith.constant 0 : i32
    %c0_i32_0 = arith.constant 0 : i32
    return %arg0, %c0_i32 : i32, i32
  }
}

</mosaic_0001>

<llo_original>
// kernel: base_layer_forward.1
$region0: #{base_layer_forward.1}
  #allocation0 [shape = 'u32[]', space=smem, size = 0x4, offset = 0x4, fixed_abs, tag = 'smem constant byte address 0x4 - core index']
  #allocation1 [shape = 'u32[72,128]{1,0:T(1,128)}', space=vmem, size = 0x9000, scoped, tag = 'internal scratch']
  %s0 = inlined_call_operand.vmem [shape: f32[160,128], index: 0, kind: input, shape index: {}]
  %s1 = inlined_call_operand.vmem [shape: f32[160,128], index: 1, kind: output, shape index: {}]
  %s2 = sld [smem:[#allocation0]]
  $region37: #{base_layer_forward.1} parent=0
    _
  %s4 = ssub.s32 1, %s2
  %s5 = scalar_select 0, %s4, %s2
  loop: start=0, step=1, limit=6
  $region2: #{base_layer_forward.1} parent=0 // loop_pre_header
    _
  $region3: #{base_layer_forward.1} parent=0 // loop_header
    %s7 = sphi 0, %s11
    %p8 = scmp.ge.s32.totalorder %s7, 6
    %s17 = sphi 0, %s19
    %s20 = sphi 0, %s17
    %s21 = sphi 0, %s20
    %s37 = sphi 0, %s21
    %s43 = sphi 0, %s45
    %s46 = sphi 0, %s43
    %s47 = sphi 0, %s46
    %s63 = sphi 0, %s47
  $region4: #{base_layer_forward.1} parent=0 // loop_header_branch
    %10 = sbr.rel (%p8) target = $region8
  $region5: #{base_layer_forward.1} parent=0 // loop_body
    %s12 = ssub.s32 %s7, 1
    %s13 = ssub.s32 %s7, 2
    %s14 = sadd.s32 %s7, 1
    %s15 = ssub.s32 %s7, %s14
    %p16 = scmp.eq.s32.totalorder %s15, 0
    %s18 = sadd.s32 %s17, 1
    %s19 = scalar_select %p16, %s17, %s18
    %p22 = pneg %p16
    %p23 = scmp.eq.s32.totalorder %s7, 3
    %p24 = por %p22, %p23
    %p25 = scmp.ne.s32.totalorder %s17, %s20
    %p26 = scmp.eq.s32.totalorder %s7, 0
    %p27 = por %p25, %p26
    %p28 = scmp.ne.s32.totalorder %s17, %s20
    %p29 = scmp.eq.s32.totalorder %s12, 3
    %p30 = por %p28, %p29
    %p31 = scmp.ne.s32.totalorder %s20, %s21
    %p32 = scmp.eq.s32.totalorder %s12, 0
    %p33 = por %p31, %p32
    %p34 = scmp.ne.s32.totalorder %s20, %s21
    %p35 = scmp.eq.s32.totalorder %s13, 3
    %p36 = por %p34, %p35
    %p38 = scmp.ne.s32.totalorder %s21, %s37
    %p39 = scmp.eq.s32.totalorder %s13, 0
    %p40 = por %p38, %p39
    %s41 = ssub.s32 %s7, %s14
    %p42 = scmp.eq.s32.totalorder %s41, 0
    %s44 = sadd.s32 %s43, 1
    %s45 = scalar_select %p42, %s43, %s44
    %p48 = pneg %p42
    %p49 = scmp.eq.s32.totalorder %s7, 3
    %p50 = por %p48, %p49
    %p51 = scmp.ne.s32.totalorder %s43, %s46
    %p52 = scmp.eq.s32.totalorder %s7, 0
    %p53 = por %p51, %p52
    %p54 = scmp.ne.s32.totalorder %s43, %s46
    %p55 = scmp.eq.s32.totalorder %s12, 3
    %p56 = por %p54, %p55
    %p57 = scmp.ne.s32.totalorder %s46, %s47
    %p58 = scmp.eq.s32.totalorder %s12, 0
    %p59 = por %p57, %p58
    %p60 = scmp.ne.s32.totalorder %s46, %s47
    %p61 = scmp.eq.s32.totalorder %s13, 3
    %p62 = por %p60, %p61
    %p64 = scmp.ne.s32.totalorder %s47, %s63
    %p65 = scmp.eq.s32.totalorder %s13, 0
    %p66 = por %p64, %p65
    %p67 = scmp.le.s32.totalorder 1, %s7
    %p68 = scmp.lt.s32.totalorder %s7, 5
    %p69 = pnand %p67, %p68
    %p70 = pneg %p69
    // Predicated region
    $region9: #{base_layer_forward.1} parent=5 // pred_check
      _
    $region10: #{base_layer_forward.1} parent=5 // pred_check_branch
      %72 = sbr.rel (%p69) target = $region12
    $region11: #{base_layer_forward.1} parent=5 // pred_region
      %s73 = ssub.s32 %s7, 1
    $region12: #{base_layer_forward.1} parent=5 // pred_fallthru
      _
    %p74 = scmp.lt.s32.totalorder %s7, 4
    // Predicated region
    $region13: #{base_layer_forward.1} parent=5 // pred_check
      %p75 = pneg %p74
    $region14: #{base_layer_forward.1} parent=5 // pred_check_branch
      %77 = sbr.rel (%p75) target = $region16
    $region15: #{base_layer_forward.1} parent=5 // pred_region
      // Predicated region
      $region17: #{base_layer_forward.1} parent=15 // pred_check
        %p78 = pneg %p27
      $region18: #{base_layer_forward.1} parent=15 // pred_check_branch
        %80 = sbr.rel (%p78) target = $region20
      $region19: #{base_layer_forward.1} parent=15 // pred_region
        %s81 = smul.u32 5, %s7
        %p82 = scmp.lt.s32.totalorder %s81, 19
        %s83 = scalar_select %p82, %s81, 19
        %s84 = smul.addr %s83, 8
        %s85 = scalar_lea.vmem %s0, %s84
        %s86 = smul.u32 5, %s7
      $region20: #{base_layer_forward.1} parent=15 // pred_fallthru
        _
    $region16: #{base_layer_forward.1} parent=5 // pred_fallthru
      _
    %p87 = scmp.le.s32.totalorder 1, %s7
    %p88 = scmp.lt.s32.totalorder %s7, 5
    %p89 = pnand %p87, %p88
    %p90 = pneg %p89
    // Predicated region
    $region21: #{base_layer_forward.1} parent=5 // pred_check
      _
    $region22: #{base_layer_forward.1} parent=5 // pred_check_branch
      %92 = sbr.rel (%p89) target = $region24
    $region23: #{base_layer_forward.1} parent=5 // pred_region
      %s93 = ssub.s32 %s7, 1
      %s94 = smul.u32 5, %s12
      %p95 = scmp.lt.s32.totalorder %s94, 19
      %s96 = scalar_select %p95, %s94, 19
      %s97 = smul.addr %s96, 8
      %s98 = scalar_lea.vmem %s0, %s97
      %p99 = pneg %p33
      %p100 = pneg %p30
      %p101 = pneg %p59
      %p102 = pneg %p56
      %s103 = smul.u32 5, %s12
      %p104 = scmp.lt.s32.totalorder %s103, 19
      %s105 = scalar_select %p104, %s103, 19
      %s106 = smul.addr %s105, 8
      %s107 = scalar_lea.vmem %s1, %s106
      %s108 = smul.u32 5, %s12
      %p109 = scmp.lt.s32.totalorder %s108, 19
      %s110 = scalar_select %p109, %s108, 19
      %s111 = smul.addr %s110, 8
      %s112 = scalar_lea.vmem %s0, %s111
      %s113 = smul.u32 5, %s12
      %s114 = smul.u32 5, %s12
      %p115 = scmp.lt.s32.totalorder %s114, 19
      %s116 = scalar_select %p115, %s114, 19
      %s117 = smul.addr %s116, 8
      %s118 = scalar_lea.vmem %s1, %s117
      %s119 = smul.u32 5, %s12
      %v120 = vld [vmem:[%s112] sm:$0xff]
      %v121 = vld [vmem:[%s112 + $0x8] sm:$0xff]
      %v122 = vld [vmem:[%s112 + $0x10] sm:$0xff]
      %v123 = vld [vmem:[%s112 + $0x18] sm:$0xff]
      %v124 = vld [vmem:[%s112 + $0x20] sm:$0xff]
      %vm125 = vcmp.ge.f32.partialorder %v120, 1.0
      %vm126 = vcmp.ge.f32.partialorder %v121, 1.0
      %vm127 = vcmp.ge.f32.partialorder %v122, 1.0
      %vm128 = vcmp.ge.f32.partialorder %v123, 1.0
      %vm129 = vcmp.ge.f32.partialorder %v124, 1.0
      %v130 = vsel %vm125, 1.0, 0.0
      %v131 = vsel %vm126, 1.0, 0.0
      %v132 = vsel %vm127, 1.0, 0.0
      %v133 = vsel %vm128, 1.0, 0.0
      %v134 = vsel %vm129, 1.0, 0.0
      %135 = vst [vmem:[%s118] sm:$0xff] %v130
      %136 = vst [vmem:[%s118 + $0x8] sm:$0xff] %v131
      %137 = vst [vmem:[%s118 + $0x10] sm:$0xff] %v132
      %138 = vst [vmem:[%s118 + $0x18] sm:$0xff] %v133
      %139 = vst [vmem:[%s118 + $0x20] sm:$0xff] %v134
      %s140 = smul.u32 5, %s12
      %p141 = scmp.lt.s32.totalorder %s140, 19
      %s142 = scalar_select %p141, %s140, 19
      %s143 = smul.addr %s142, 8
      %s144 = scalar_lea.vmem %s1, %s143
      // Predicated region
      $region25: #{base_layer_forward.1} parent=23 // pred_check
        %p145 = pneg %p56
      $region26: #{base_layer_forward.1} parent=23 // pred_check_branch
        %147 = sbr.rel (%p145) target = $region28
      $region27: #{base_layer_forward.1} parent=23 // pred_region
        %s148 = smul.u32 5, %s12
      $region28: #{base_layer_forward.1} parent=23 // pred_fallthru
        _
    $region24: #{base_layer_forward.1} parent=5 // pred_fallthru
      _
    %p149 = scmp.le.s32.totalorder 2, %s7
    // Predicated region
    $region29: #{base_layer_forward.1} parent=5 // pred_check
      %p150 = pneg %p149
    $region30: #{base_layer_forward.1} parent=5 // pred_check_branch
      %152 = sbr.rel (%p150) target = $region32
    $region31: #{base_layer_forward.1} parent=5 // pred_region
      %s153 = ssub.s32 %s7, 2
      // Predicated region
      $region33: #{base_layer_forward.1} parent=31 // pred_check
        %p154 = pneg %p62
      $region34: #{base_layer_forward.1} parent=31 // pred_check_branch
        %156 = sbr.rel (%p154) target = $region36
      $region35: #{base_layer_forward.1} parent=31 // pred_region
        %s157 = smul.u32 5, %s13
        %p158 = scmp.lt.s32.totalorder %s157, 19
        %s159 = scalar_select %p158, %s157, 19
        %s160 = smul.addr %s159, 8
        %s161 = scalar_lea.vmem %s1, %s160
      $region36: #{base_layer_forward.1} parent=31 // pred_fallthru
        _
    $region32: #{base_layer_forward.1} parent=5 // pred_fallthru
      _
  $region6: #{base_layer_forward.1} parent=0 // loop_footer
    %s11 = sadd.s32 1, %s7
  $region7: #{base_layer_forward.1} parent=0 // loop_footer_branch
    %6 = sbr.rel target = $region3
  $region8: #{base_layer_forward.1} parent=0 // loop_exit
    _

</llo_original>
